<compile_context>
chip_gen: v6e
topology: v6e:2x2x1
jax: 0.10.0
libtpu: 0.0.40
codegen_flags: <defaults>
</compile_context>

<pallas_src>
import functools

import jax
import jax.numpy as jnp
from jax.experimental import pallas as pl
from jax.experimental.pallas import tpu as pltpu


_EPS = 1e-5            # nn.LayerNorm default eps
_MAX_TM = 2048         # upper bound on the batch (lane) tile


def _round_up(x, m):
    return (x + m - 1) // m * m


def _vmem_budget_bytes():
    """Generation-aware VMEM budget (physical capacity minus headroom).

    v5e/v6e have 128 MiB per core -> allow ~100 MiB; v7x has 64 MiB -> ~56 MiB.
    Falls back to the conservative 56 MiB if the query is unavailable, which is
    safe on every generation.
    """
    try:
        phys = pltpu.get_tpu_info().vmem_capacity_bytes
    except Exception:
        phys = 64 * 1024 * 1024
    return int(min(phys - 8 * 1024 * 1024, 100 * 1024 * 1024))


_VMEM_BUDGET = _vmem_budget_bytes()


def _silu(h):
    # sigmoid = 1 / (1 + exp(-h)); exp and the approximate reciprocal both
    # ride the otherwise-idle EUP slot, keeping VALU pressure down.
    return h * pl.reciprocal(1.0 + jnp.exp(-h), approx=True)


def _mlp_kernel(x_ref,
                w1_ref, b1_ref, g1_ref, be1_ref,
                w2_ref, b2_ref, g2_ref, be2_ref,
                w3_ref, b3_ref,
                o_ref,
                *, inv_ch, use_mxu_proj):
    """Transposed-frame MLP tile: activations are (ch_pad, TM), batch on lanes.

    LayerNorm mean-centering has been folded into (w1, b1) / (w2, b2) by the
    wrapper, so each LayerNorm here is a one-pass E[h^2] normalization.
    """
    x = x_ref[...]                                                   # bf16

    # --- Linear 1 (MXU, bf16 in / f32 acc), mean-centered weights ---
    h = jnp.dot(w1_ref[...], x, preferred_element_type=jnp.float32)
    h = h + b1_ref[...]

    # --- LayerNorm 1 (mean already ~0) + SiLU (f32 on VPU/XLU/EUP) ---
    var = jnp.sum(h * h, axis=0, keepdims=True) * inv_ch
    h = h * jax.lax.rsqrt(var + _EPS) * g1_ref[...] + be1_ref[...]
    h = _silu(h)

    # --- Linear 2 (MXU) ---
    h = jnp.dot(w2_ref[...], h.astype(jnp.bfloat16),
                preferred_element_type=jnp.float32)
    h = h + b2_ref[...]

    # --- LayerNorm 2 + SiLU ---
    var = jnp.sum(h * h, axis=0, keepdims=True) * inv_ch
    h = h * jax.lax.rsqrt(var + _EPS) * g2_ref[...] + be2_ref[...]
    h = _silu(h)

    # --- Linear 3 -> lane-dense (1, TM) output ---
    if use_mxu_proj:
        # ch >= 128: the MXU has slack after the two main matmuls; an 8-row
        # (zero-padded w3) matmul is nearly free and avoids a ch/8-deep VALU
        # add tree.  Row 0 carries w3, rows 1..7 are zero.
        out = jnp.dot(w3_ref[...], h.astype(jnp.bfloat16),
                      preferred_element_type=jnp.float32)[0:1, :]
    else:
        # Tiny ch: VPU multiply + XLU sublane reduce beats a mostly-padding
        # MXU pass.
        out = jnp.sum(h * w3_ref[...], axis=0, keepdims=True)

    o_ref[...] = (out + b3_ref[0]).astype(o_ref.dtype)


@jax.jit
def projection_discriminator(x, params):
    """x: (N, ch, H, W) float32 NCHW.  Returns (N, 1) float32.

    `params` are the PyTorch-layout f32 parameters (see init_params).  All
    layout prep (mean folding, channel padding, bf16 casts) is done here in
    f32 and is negligible relative to the kernel.
    """
    (w1, b1, g1, be1, w2, b2, g2, be2, w3, b3) = params
    ch = w1.shape[0]

    # ---- Fold LayerNorm mean-centering into the preceding linear (exact):
    # mean_c(Wx + b) = colmean(W) @ x + mean(b), so centering commutes with
    # the matmul.  Done in f32 BEFORE the bf16 cast (avoids rounding bias).
    w1c = w1 - jnp.mean(w1, axis=0, keepdims=True)
    b1c = b1 - jnp.mean(b1)
    w2c = w2 - jnp.mean(w2, axis=0, keepdims=True)
    b2c = b2 - jnp.mean(b2)

    # ---- Channel padding for MXU-aligned cadence.  Padded channels carry
    # zero weights/bias/gamma/beta so they stay exactly zero end-to-end and
    # the LN statistics (divided by the real ch) are unchanged.
    ch_p = _round_up(ch, 128) if ch >= 128 else _round_up(ch, 8)
    pc = ch_p - ch

    def pad_mat(w):                      # (ch, ch) -> (ch_p, ch_p)
        return jnp.pad(w, ((0, pc), (0, pc)))

    def pad_col(v):                      # (ch,) -> (ch_p, 1)
        return jnp.pad(v, (0, pc)).reshape(ch_p, 1)

    w1b = pad_mat(w1c).astype(jnp.bfloat16)
    w2b = pad_mat(w2c).astype(jnp.bfloat16)
    b1p, g1p, be1p = pad_col(b1c), pad_col(g1), pad_col(be1)
    b2p, g2p, be2p = pad_col(b2c), pad_col(g2), pad_col(be2)

    use_mxu_proj = ch_p >= 128
    w3_vec = jnp.pad(w3.reshape(-1), (0, pc))                        # (ch_p,)
    if use_mxu_proj:
        # 8-row zero-padded w3 (row 0 = w3) so the matmul M-dim is sublane
        # aligned; bf16 for the MXU.
        w3_in = jnp.zeros((8, ch_p), jnp.float32).at[0].set(w3_vec)
        w3_in = w3_in.astype(jnp.bfloat16)
        w3_spec = pl.BlockSpec((8, ch_p), lambda i: (0, 0))
    else:
        w3_in = w3_vec.reshape(ch_p, 1)                              # f32 col
        w3_spec = pl.BlockSpec((ch_p, 1), lambda i: (0, 0))
    b3_in = b3.reshape(1).astype(jnp.float32)                        # SMEM

    # ---- Glue: (0,0) spatial pixel, transposed to (ch_p, N), bf16 for MXU.
    xs_t = x[..., 0, 0].T.astype(jnp.bfloat16)                       # (ch, N)
    if pc:
        xs_t = jnp.pad(xs_t, ((0, pc), (0, 0)))
    n = xs_t.shape[1]

    # ---- VMEM-aware batch tile (lane axis), multiple of 128.
    # Resident params (counted with 2-deep buffers): two bf16 (ch_p, ch_p)
    # weights + the (ch_p, 1) columns (which pad to 128 lanes in VMEM).
    resident = 2 * (2 * ch_p * ch_p * 2 + 7 * ch_p * 128 * 4)
    # Per unit of TM: double-buffered bf16 activation tile + f32 output row
    # + ~8 live f32 (ch_p, TM) intermediates of compiler-scratch headroom.
    per_tm = 2 * (2 * ch_p + 4) + 8 * 4 * ch_p
    avail = max(_VMEM_BUDGET - resident, 0)
    tm_cap = max(128, (avail // per_tm) // 128 * 128)
    tm = min(_MAX_TM, tm_cap)
    if n > 128:
        # v7x has 2 TensorCores; give the "parallel" batch axis >= 2 steps
        # whenever the batch is big enough to split.
        tm = min(tm, _round_up((n + 1) // 2, 128))
    tm = max(128, min(tm, _round_up(n, 128)))

    n_pad = _round_up(n, tm)
    if n_pad != n:
        xs_t = jnp.pad(xs_t, ((0, 0), (0, n_pad - n)))
    grid = (n_pad // tm,)

    kernel = functools.partial(_mlp_kernel, inv_ch=1.0 / ch,
                               use_mxu_proj=use_mxu_proj)

    def col_spec():
        return pl.BlockSpec((ch_p, 1), lambda i: (0, 0))

    out_padded = pl.pallas_call(
        kernel,
        out_shape=jax.ShapeDtypeStruct((1, n_pad), jnp.float32),
        grid=grid,
        in_specs=[
            pl.BlockSpec((ch_p, tm), lambda i: (0, i)),     # activation tile
            pl.BlockSpec((ch_p, ch_p), lambda i: (0, 0)),   # w1 (VMEM resident)
            col_spec(), col_spec(), col_spec(),             # b1, gamma1, beta1
            pl.BlockSpec((ch_p, ch_p), lambda i: (0, 0)),   # w2 (VMEM resident)
            col_spec(), col_spec(), col_spec(),             # b2, gamma2, beta2
            w3_spec,                                        # w3 (row or column)
            pl.BlockSpec(memory_space=pltpu.MemorySpace.SMEM),  # b3 scalar
        ],
        out_specs=pl.BlockSpec((1, tm), lambda i: (0, i)),
        compiler_params=pltpu.CompilerParams(
            dimension_semantics=("parallel",),
            vmem_limit_bytes=_VMEM_BUDGET),
    )(xs_t, w1b, b1p, g1p, be1p, w2b, b2p, g2p, be2p, w3_in, b3_in)

    n_real = x.shape[0]
    return out_padded[0, :n_real][:, None]                           # (N, 1)


def init_params(key, ch):
    """PyTorch-shaped f32 parameters for ProjectionDiscriminator(ch)."""
    ks = jax.random.split(key, 6)
    bound = 1.0 / float(ch) ** 0.5

    w1 = jax.random.uniform(ks[0], (ch, ch), jnp.float32, -bound, bound)
    b1 = jax.random.uniform(ks[1], (ch,), jnp.float32, -bound, bound)
    g1 = jnp.ones((ch,), jnp.float32)
    be1 = jnp.zeros((ch,), jnp.float32)

    w2 = jax.random.uniform(ks[2], (ch, ch), jnp.float32, -bound, bound)
    b2 = jax.random.uniform(ks[3], (ch,), jnp.float32, -bound, bound)
    g2 = jnp.ones((ch,), jnp.float32)
    be2 = jnp.zeros((ch,), jnp.float32)

    w3 = jax.random.uniform(ks[4], (1, ch), jnp.float32, -bound, bound)
    b3 = jax.random.uniform(ks[5], (1,), jnp.float32, -bound, bound)

    return (w1, b1, g1, be1, w2, b2, g2, be2, w3, b3)


def reference(x, params):
    """Pure-JAX f32 reference (PyTorch-equivalent) for correctness check."""
    (w1, b1, g1, be1, w2, b2, g2, be2, w3, b3) = params
    h = x[..., 0, 0].astype(jnp.float32)                             # (N, ch)

    def ln(h, g, be):
        mu = jnp.mean(h, -1, keepdims=True)
        var = jnp.mean((h - mu) ** 2, -1, keepdims=True)
        return (h - mu) / jnp.sqrt(var + _EPS) * g + be

    h = h @ w1.T + b1
    h = ln(h, g1, be1)
    h = h * jax.nn.sigmoid(h)

    h = h @ w2.T + b2
    h = ln(h, g2, be2)
    h = h * jax.nn.sigmoid(h)

    return h @ w3.T + b3                                             # (N, 1)


if __name__ == "__main__":
    key = jax.random.PRNGKey(0)

    def run_case(case_key, n, ch, hw):
        k_x, k_p = jax.random.split(case_key)
        x = jax.random.normal(k_x, (n, ch, hw, hw), jnp.float32)
        params = init_params(k_p, ch)
        out = jax.block_until_ready(projection_discriminator(x, params))
        ref = reference(x, params)
        assert out.shape == (n, 1), out.shape
        # bf16 MXU operands + approx-reciprocal sigmoid -> loosened tolerance
        # (error grows roughly with sqrt(ch)).
        assert jnp.allclose(out, ref, atol=5e-2, rtol=5e-2), (
            float(jnp.max(jnp.abs(out - ref))))

    k1, k2 = jax.random.split(key)
    # Small case: VPU projection path, single grid step.
    run_case(k1, 2, 32, 16)
    # Larger case: MXU projection path, batch padding, multi-step grid.
    run_case(k2, 260, 256, 4)

    print("KERNEL_OK")
</pallas_src>

<mosaic_0001>
module attributes {stable_mosaic.version = 11 : i64} {
  func.func @_mlp_kernel(%arg0: i32, %arg1: memref<32x128xbf16, #tpu.memory_space<vmem>>, %arg2: memref<32x32xbf16, #tpu.memory_space<vmem>>, %arg3: memref<32x1xf32, #tpu.memory_space<vmem>>, %arg4: memref<32x1xf32, #tpu.memory_space<vmem>>, %arg5: memref<32x1xf32, #tpu.memory_space<vmem>>, %arg6: memref<32x32xbf16, #tpu.memory_space<vmem>>, %arg7: memref<32x1xf32, #tpu.memory_space<vmem>>, %arg8: memref<32x1xf32, #tpu.memory_space<vmem>>, %arg9: memref<32x1xf32, #tpu.memory_space<vmem>>, %arg10: memref<32x1xf32, #tpu.memory_space<vmem>>, %arg11: memref<1xf32, #tpu.memory_space<smem>>, %arg12: memref<1x128xf32, #tpu.memory_space<vmem>>) attributes {dimension_semantics = [#tpu.dimension_semantics<parallel>], iteration_bounds = array<i64: 1>, scalar_prefetch = 0 : i64, scratch_operands = 0 : i64, tpu.core_type = #tpu.core_type<tc>, window_params = [{transform_indices = @transform_0, window_bounds = array<i64: 32, 128>}, {pipeline_mode = #tpu.pipeline_mode<synchronous>, transform_indices = @transform_1, window_bounds = array<i64: 32, 32>}, {pipeline_mode = #tpu.pipeline_mode<synchronous>, transform_indices = @transform_2, window_bounds = array<i64: 32, 1>}, {pipeline_mode = #tpu.pipeline_mode<synchronous>, transform_indices = @transform_3, window_bounds = array<i64: 32, 1>}, {pipeline_mode = #tpu.pipeline_mode<synchronous>, transform_indices = @transform_4, window_bounds = array<i64: 32, 1>}, {pipeline_mode = #tpu.pipeline_mode<synchronous>, transform_indices = @transform_5, window_bounds = array<i64: 32, 32>}, {pipeline_mode = #tpu.pipeline_mode<synchronous>, transform_indices = @transform_6, window_bounds = array<i64: 32, 1>}, {pipeline_mode = #tpu.pipeline_mode<synchronous>, transform_indices = @transform_7, window_bounds = array<i64: 32, 1>}, {pipeline_mode = #tpu.pipeline_mode<synchronous>, transform_indices = @transform_8, window_bounds = array<i64: 32, 1>}, {pipeline_mode = #tpu.pipeline_mode<synchronous>, transform_indices = @transform_9, window_bounds = array<i64: 32, 1>}, {transform_indices = @transform_10, window_bounds = array<i64: 1>}, {transform_indices = @transform_11, window_bounds = array<i64: 1, 128>}]} {
    %c0 = arith.constant 0 : index
    %c0_0 = arith.constant 0 : index
    %0 = vector.load %arg1[%c0, %c0_0] : memref<32x128xbf16, #tpu.memory_space<vmem>>, vector<32x128xbf16>
    %c0_1 = arith.constant 0 : index
    %c0_2 = arith.constant 0 : index
    %1 = vector.load %arg2[%c0_1, %c0_2] : memref<32x32xbf16, #tpu.memory_space<vmem>>, vector<32x32xbf16>
    %cst = arith.constant dense<0.000000e+00> : vector<32x128xf32>
    %2 = tpu.matmul %1, %0, %cst {dimension_numbers = #tpu.dot_dimension_numbers<[1], [0], [0], [1], [0, 0, 1, 1], [], []>} : vector<32x32xbf16>, vector<32x128xbf16>, vector<32x128xf32> -> vector<32x128xf32>
    %c0_3 = arith.constant 0 : index
    %c0_4 = arith.constant 0 : index
    %3 = vector.load %arg3[%c0_3, %c0_4] : memref<32x1xf32, #tpu.memory_space<vmem>>, vector<32x1xf32>
    %4 = vector.broadcast %3 : vector<32x1xf32> to vector<32x128xf32>
    %5 = arith.addf %2, %4 : vector<32x128xf32>
    %6 = arith.mulf %5, %5 : vector<32x128xf32>
    %cst_5 = arith.constant dense<0.000000e+00> : vector<128xf32>
    %7 = vector.multi_reduction <add>, %6, %cst_5 [0] : vector<32x128xf32> to vector<128xf32>
    %8 = vector.shape_cast %7 : vector<128xf32> to vector<1x128xf32>
    %cst_6 = arith.constant 3.125000e-02 : f32
    %9 = vector.broadcast %cst_6 : f32 to vector<1x128xf32>
    %10 = arith.mulf %8, %9 : vector<1x128xf32>
    %cst_7 = arith.constant 9.99999974E-6 : f32
    %11 = vector.broadcast %cst_7 : f32 to vector<1x128xf32>
    %12 = arith.addf %10, %11 : vector<1x128xf32>
    %13 = math.rsqrt %12 : vector<1x128xf32>
    %14 = vector.broadcast %13 : vector<1x128xf32> to vector<32x128xf32>
    %15 = arith.mulf %5, %14 : vector<32x128xf32>
    %c0_8 = arith.constant 0 : index
    %c0_9 = arith.constant 0 : index
    %16 = vector.load %arg4[%c0_8, %c0_9] : memref<32x1xf32, #tpu.memory_space<vmem>>, vector<32x1xf32>
    %17 = vector.broadcast %16 : vector<32x1xf32> to vector<32x128xf32>
    %18 = arith.mulf %15, %17 : vector<32x128xf32>
    %c0_10 = arith.constant 0 : index
    %c0_11 = arith.constant 0 : index
    %19 = vector.load %arg5[%c0_10, %c0_11] : memref<32x1xf32, #tpu.memory_space<vmem>>, vector<32x1xf32>
    %20 = vector.broadcast %19 : vector<32x1xf32> to vector<32x128xf32>
    %21 = arith.addf %18, %20 : vector<32x128xf32>
    %cst_12 = arith.constant 0.000000e+00 : f32
    %22 = vector.broadcast %cst_12 : f32 to vector<32x128xf32>
    %23 = arith.subf %22, %21 : vector<32x128xf32>
    %24 = math.exp %23 : vector<32x128xf32>
    %cst_13 = arith.constant 1.000000e+00 : f32
    %25 = vector.broadcast %cst_13 : f32 to vector<32x128xf32>
    %26 = arith.addf %25, %24 : vector<32x128xf32>
    %27 = tpu.reciprocal %26 {approx = true} : vector<32x128xf32> -> vector<32x128xf32>
    %28 = arith.mulf %21, %27 : vector<32x128xf32>
    %c0_14 = arith.constant 0 : index
    %c0_15 = arith.constant 0 : index
    %29 = vector.load %arg6[%c0_14, %c0_15] : memref<32x32xbf16, #tpu.memory_space<vmem>>, vector<32x32xbf16>
    %30 = arith.truncf %28 : vector<32x128xf32> to vector<32x128xbf16>
    %cst_16 = arith.constant dense<0.000000e+00> : vector<32x128xf32>
    %31 = tpu.matmul %29, %30, %cst_16 {dimension_numbers = #tpu.dot_dimension_numbers<[1], [0], [0], [1], [0, 0, 1, 1], [], []>} : vector<32x32xbf16>, vector<32x128xbf16>, vector<32x128xf32> -> vector<32x128xf32>
    %c0_17 = arith.constant 0 : index
    %c0_18 = arith.constant 0 : index
    %32 = vector.load %arg7[%c0_17, %c0_18] : memref<32x1xf32, #tpu.memory_space<vmem>>, vector<32x1xf32>
    %33 = vector.broadcast %32 : vector<32x1xf32> to vector<32x128xf32>
    %34 = arith.addf %31, %33 : vector<32x128xf32>
    %35 = arith.mulf %34, %34 : vector<32x128xf32>
    %cst_19 = arith.constant dense<0.000000e+00> : vector<128xf32>
    %36 = vector.multi_reduction <add>, %35, %cst_19 [0] : vector<32x128xf32> to vector<128xf32>
    %37 = vector.shape_cast %36 : vector<128xf32> to vector<1x128xf32>
    %cst_20 = arith.constant 3.125000e-02 : f32
    %38 = vector.broadcast %cst_20 : f32 to vector<1x128xf32>
    %39 = arith.mulf %37, %38 : vector<1x128xf32>
    %cst_21 = arith.constant 9.99999974E-6 : f32
    %40 = vector.broadcast %cst_21 : f32 to vector<1x128xf32>
    %41 = arith.addf %39, %40 : vector<1x128xf32>
    %42 = math.rsqrt %41 : vector<1x128xf32>
    %43 = vector.broadcast %42 : vector<1x128xf32> to vector<32x128xf32>
    %44 = arith.mulf %34, %43 : vector<32x128xf32>
    %c0_22 = arith.constant 0 : index
    %c0_23 = arith.constant 0 : index
    %45 = vector.load %arg8[%c0_22, %c0_23] : memref<32x1xf32, #tpu.memory_space<vmem>>, vector<32x1xf32>
    %46 = vector.broadcast %45 : vector<32x1xf32> to vector<32x128xf32>
    %47 = arith.mulf %44, %46 : vector<32x128xf32>
    %c0_24 = arith.constant 0 : index
    %c0_25 = arith.constant 0 : index
    %48 = vector.load %arg9[%c0_24, %c0_25] : memref<32x1xf32, #tpu.memory_space<vmem>>, vector<32x1xf32>
    %49 = vector.broadcast %48 : vector<32x1xf32> to vector<32x128xf32>
    %50 = arith.addf %47, %49 : vector<32x128xf32>
    %cst_26 = arith.constant 0.000000e+00 : f32
    %51 = vector.broadcast %cst_26 : f32 to vector<32x128xf32>
    %52 = arith.subf %51, %50 : vector<32x128xf32>
    %53 = math.exp %52 : vector<32x128xf32>
    %cst_27 = arith.constant 1.000000e+00 : f32
    %54 = vector.broadcast %cst_27 : f32 to vector<32x128xf32>
    %55 = arith.addf %54, %53 : vector<32x128xf32>
    %56 = tpu.reciprocal %55 {approx = true} : vector<32x128xf32> -> vector<32x128xf32>
    %57 = arith.mulf %50, %56 : vector<32x128xf32>
    %c0_28 = arith.constant 0 : index
    %c0_29 = arith.constant 0 : index
    %58 = vector.load %arg10[%c0_28, %c0_29] : memref<32x1xf32, #tpu.memory_space<vmem>>, vector<32x1xf32>
    %59 = vector.broadcast %58 : vector<32x1xf32> to vector<32x128xf32>
    %60 = arith.mulf %57, %59 : vector<32x128xf32>
    %cst_30 = arith.constant dense<0.000000e+00> : vector<128xf32>
    %61 = vector.multi_reduction <add>, %60, %cst_30 [0] : vector<32x128xf32> to vector<128xf32>
    %62 = vector.shape_cast %61 : vector<128xf32> to vector<1x128xf32>
    %c0_31 = arith.constant 0 : index
    %63 = memref.load %arg11[%c0_31] : memref<1xf32, #tpu.memory_space<smem>>
    %64 = vector.broadcast %63 : f32 to vector<1x128xf32>
    %65 = arith.addf %62, %64 : vector<1x128xf32>
    %c0_32 = arith.constant 0 : index
    %c0_33 = arith.constant 0 : index
    %66 = vector.load %arg12[%c0_32, %c0_33] : memref<1x128xf32, #tpu.memory_space<vmem>>, vector<1x128xf32>
    tpu.vector_store %arg12[%c0_32, %c0_33], %65 {strides = array<i32>} : memref<1x128xf32, #tpu.memory_space<vmem>>, vector<1x128xf32>,
    return
  }
  func.func @transform_0(%arg0: i32) -> (i32, i32) {
    %c0_i32 = arith.constant 0 : i32
    %c0_i32_0 = arith.constant 0 : i32
    return %c0_i32, %arg0 : i32, i32
  }
  func.func @transform_1(%arg0: i32) -> (i32, i32) {
    %c0_i32 = arith.constant 0 : i32
    %c0_i32_0 = arith.constant 0 : i32
    %c0_i32_1 = arith.constant 0 : i32
    return %c0_i32, %c0_i32_0 : i32, i32
  }
  func.func @transform_2(%arg0: i32) -> (i32, i32) {
    %c0_i32 = arith.constant 0 : i32
    %c0_i32_0 = arith.constant 0 : i32
    %c0_i32_1 = arith.constant 0 : i32
    return %c0_i32, %c0_i32_0 : i32, i32
  }
  func.func @transform_3(%arg0: i32) -> (i32, i32) {
    %c0_i32 = arith.constant 0 : i32
    %c0_i32_0 = arith.constant 0 : i32
    %c0_i32_1 = arith.constant 0 : i32
    return %c0_i32, %c0_i32_0 : i32, i32
  }
  func.func @transform_4(%arg0: i32) -> (i32, i32) {
    %c0_i32 = arith.constant 0 : i32
    %c0_i32_0 = arith.constant 0 : i32
    %c0_i32_1 = arith.constant 0 : i32
    return %c0_i32, %c0_i32_0 : i32, i32
  }
  func.func @transform_5(%arg0: i32) -> (i32, i32) {
    %c0_i32 = arith.constant 0 : i32
    %c0_i32_0 = arith.constant 0 : i32
    %c0_i32_1 = arith.constant 0 : i32
    return %c0_i32, %c0_i32_0 : i32, i32
  }
  func.func @transform_6(%arg0: i32) -> (i32, i32) {
    %c0_i32 = arith.constant 0 : i32
    %c0_i32_0 = arith.constant 0 : i32
    %c0_i32_1 = arith.constant 0 : i32
    return %c0_i32, %c0_i32_0 : i32, i32
  }
  func.func @transform_7(%arg0: i32) -> (i32, i32) {
    %c0_i32 = arith.constant 0 : i32
    %c0_i32_0 = arith.constant 0 : i32
    %c0_i32_1 = arith.constant 0 : i32
    return %c0_i32, %c0_i32_0 : i32, i32
  }
  func.func @transform_8(%arg0: i32) -> (i32, i32) {
    %c0_i32 = arith.constant 0 : i32
    %c0_i32_0 = arith.constant 0 : i32
    %c0_i32_1 = arith.constant 0 : i32
    return %c0_i32, %c0_i32_0 : i32, i32
  }
  func.func @transform_9(%arg0: i32) -> (i32, i32) {
    %c0_i32 = arith.constant 0 : i32
    %c0_i32_0 = arith.constant 0 : i32
    %c0_i32_1 = arith.constant 0 : i32
    return %c0_i32, %c0_i32_0 : i32, i32
  }
  func.func @transform_10(%arg0: i32) -> i32 {
    %c0_i32 = arith.constant 0 : i32
    %c0_i32_0 = arith.constant 0 : i32
    return %c0_i32 : i32
  }
  func.func @transform_11(%arg0: i32) -> (i32, i32) {
    %c0_i32 = arith.constant 0 : i32
    %c0_i32_0 = arith.constant 0 : i32
    return %c0_i32, %arg0 : i32, i32
  }
}

</mosaic_0001>

<llo_original>
// kernel: projection_discriminator.1
$region0: #{projection_discriminator.1}
  #allocation0 [shape = 'u32[]', space=smem, size = 0x4, offset = 0x4, fixed_abs, tag = 'smem constant byte address 0x4 - core index']
  #allocation1 [shape = 'u32[144,128]{1,0:T(1,128)}', space=vmem, size = 0x12000, scoped, tag = 'internal scratch']
  #allocation2 [shape = 'f32[1]{0:T(128)S(6)}', space=smem, size = 0x200, scoped, tag = 'scoped memory for projection_discriminator.1']
  %s0 = inlined_call_operand.vmem [shape: bf16[32,128], index: 0, kind: input, shape index: {}]
  %s1 = inlined_call_operand.vmem [shape: bf16[32,32], index: 1, kind: input, shape index: {}]
  %s2 = inlined_call_operand.vmem [shape: f32[32,1], index: 2, kind: input, shape index: {}]
  %s3 = inlined_call_operand.vmem [shape: f32[32,1], index: 3, kind: input, shape index: {}]
  %s4 = inlined_call_operand.vmem [shape: f32[32,1], index: 4, kind: input, shape index: {}]
  %s5 = inlined_call_operand.vmem [shape: bf16[32,32], index: 5, kind: input, shape index: {}]
  %s6 = inlined_call_operand.vmem [shape: f32[32,1], index: 6, kind: input, shape index: {}]
  %s7 = inlined_call_operand.vmem [shape: f32[32,1], index: 7, kind: input, shape index: {}]
  %s8 = inlined_call_operand.vmem [shape: f32[32,1], index: 8, kind: input, shape index: {}]
  %s9 = inlined_call_operand.vmem [shape: f32[32,1], index: 9, kind: input, shape index: {}]
  %s10 = inlined_call_operand.<no memory space> [shape: f32[1], index: 10, kind: input, shape index: {}]
  %s11 = inlined_call_operand.vmem [shape: f32[1,128], index: 11, kind: output, shape index: {}]
  %s12 = sld [smem:[#allocation0]]
  $region54: #{projection_discriminator.1} parent=0
    _
  %s14 = ssub.s32 1, %s12
  %s15 = scalar_select 0, %s14, %s12
  %16 = sst [smem:[#allocation2]] %s10
  // Predicated region
  $region2: #{projection_discriminator.1} parent=0 // pred_check
    _
  $region3: #{projection_discriminator.1} parent=0 // pred_check_branch
    %18 = sbr.rel (0) target = $region5
  $region4: #{projection_discriminator.1} parent=0 // pred_region
    _
  $region5: #{projection_discriminator.1} parent=0 // pred_fallthru
    _
  // Predicated region
  $region6: #{projection_discriminator.1} parent=0 // pred_check
    _
  $region7: #{projection_discriminator.1} parent=0 // pred_check_branch
    %20 = sbr.rel (0) target = $region9
  $region8: #{projection_discriminator.1} parent=0 // pred_region
    _
  $region9: #{projection_discriminator.1} parent=0 // pred_fallthru
    _
  // Predicated region
  $region10: #{projection_discriminator.1} parent=0 // pred_check
    _
  $region11: #{projection_discriminator.1} parent=0 // pred_check_branch
    %22 = sbr.rel (0) target = $region13
  $region12: #{projection_discriminator.1} parent=0 // pred_region
    _
  $region13: #{projection_discriminator.1} parent=0 // pred_fallthru
    _
  // Predicated region
  $region14: #{projection_discriminator.1} parent=0 // pred_check
    _
  $region15: #{projection_discriminator.1} parent=0 // pred_check_branch
    %24 = sbr.rel (0) target = $region17
  $region16: #{projection_discriminator.1} parent=0 // pred_region
    _
  $region17: #{projection_discriminator.1} parent=0 // pred_fallthru
    _
  // Predicated region
  $region18: #{projection_discriminator.1} parent=0 // pred_check
    _
  $region19: #{projection_discriminator.1} parent=0 // pred_check_branch
    %26 = sbr.rel (0) target = $region21
  $region20: #{projection_discriminator.1} parent=0 // pred_region
    _
  $region21: #{projection_discriminator.1} parent=0 // pred_fallthru
    _
  // Predicated region
  $region22: #{projection_discriminator.1} parent=0 // pred_check
    _
  $region23: #{projection_discriminator.1} parent=0 // pred_check_branch
    %28 = sbr.rel (0) target = $region25
  $region24: #{projection_discriminator.1} parent=0 // pred_region
    _
  $region25: #{projection_discriminator.1} parent=0 // pred_fallthru
    _
  // Predicated region
  $region26: #{projection_discriminator.1} parent=0 // pred_check
    _
  $region27: #{projection_discriminator.1} parent=0 // pred_check_branch
    %30 = sbr.rel (0) target = $region29
  $region28: #{projection_discriminator.1} parent=0 // pred_region
    _
  $region29: #{projection_discriminator.1} parent=0 // pred_fallthru
    _
  // Predicated region
  $region30: #{projection_discriminator.1} parent=0 // pred_check
    _
  $region31: #{projection_discriminator.1} parent=0 // pred_check_branch
    %32 = sbr.rel (0) target = $region33
  $region32: #{projection_discriminator.1} parent=0 // pred_region
    _
  $region33: #{projection_discriminator.1} parent=0 // pred_fallthru
    _
  // Predicated region
  $region34: #{projection_discriminator.1} parent=0 // pred_check
    _
  $region35: #{projection_discriminator.1} parent=0 // pred_check_branch
    %34 = sbr.rel (0) target = $region37
  $region36: #{projection_discriminator.1} parent=0 // pred_region
    _
  $region37: #{projection_discriminator.1} parent=0 // pred_fallthru
    _
  // Predicated region
  $region38: #{projection_discriminator.1} parent=0 // pred_check
    _
  $region39: #{projection_discriminator.1} parent=0 // pred_check_branch
    %36 = sbr.rel (0) target = $region41
  $region40: #{projection_discriminator.1} parent=0 // pred_region
    _
  $region41: #{projection_discriminator.1} parent=0 // pred_fallthru
    _
  // Predicated region
  $region42: #{projection_discriminator.1} parent=0 // pred_check
    _
  $region43: #{projection_discriminator.1} parent=0 // pred_check_branch
    %38 = sbr.rel (0) target = $region45
  $region44: #{projection_discriminator.1} parent=0 // pred_region
    _
  $region45: #{projection_discriminator.1} parent=0 // pred_fallthru
    _
  %v40 = vld [vmem:[%s0] sm:$0xf]
  %v41 = vld [vmem:[%s0 + $0x4] sm:$0xf]
  %v42 = vld [vmem:[%s0 + $0x8] sm:$0xf]
  %v43 = vld [vmem:[%s0 + $0xc] sm:$0xf]
  %v44 = vld [vmem:[%s1] sm:$0xf]
  %v45 = vld [vmem:[%s1 + $0x4] sm:$0xf]
  %v46 = vld [vmem:[%s1 + $0x8] sm:$0xf]
  %v47 = vld [vmem:[%s1 + $0xc] sm:$0xf]
  %v48 = vld [vmem:[%s2] sm:$0xff]
  %v49 = vld [vmem:[%s2 + $0x8] sm:$0xff]
  %v50 = vld [vmem:[%s2 + $0x10] sm:$0xff]
  %v51 = vld [vmem:[%s2 + $0x18] sm:$0xff]
  %53 = vset.pattern.permute.xlu0 0
  %54 = vperm.xlu0 %53, %v48
  %v55 = vpop.permute.xlu0 %54
  %58 = vset.pattern.permute.xlu0 0
  %59 = vperm.xlu0 %58, %v49
  %v60 = vpop.permute.xlu0 %59
  %63 = vset.pattern.permute.xlu0 0
  %64 = vperm.xlu0 %63, %v50
  %v65 = vpop.permute.xlu0 %64
  %68 = vset.pattern.permute.xlu0 0
  %69 = vperm.xlu0 %68, %v51
  %v70 = vpop.permute.xlu0 %69
  %v76 = vunpack.c.l.b16 %v44
  %v77 = vunpack.c.l.b16 %v45
  %v78 = vunpack.c.l.b16 %v46
  %v79 = vunpack.c.l.b16 %v47
  %v80 = vpack.c.b16 %v77, %v76
  %v81 = vpack.c.b16 %v79, %v78
  %v86 = vunpack.c.l.b16 %v40
  %v87 = vunpack.c.l.b16 %v41
  %v88 = vunpack.c.l.b16 %v42
  %v89 = vunpack.c.l.b16 %v43
  %v90 = vpack.c.b16 %v87, %v86
  %v91 = vpack.c.b16 %v89, %v88
  %vm94 = vcmask 261120
  %v96 = vsel %vm94, %v80, 0
  %v99 = vsel %vm94, %v81, 0
  %101 = vmatprep.subr.bf16.mxu0 0
  %102 = vmatpush1.bf16.msra.mxu0 0
  %103 = vmatprep.subr.bf16.mxu0 0
  %104 = vmatpush1.bf16.msra.mxu0 0
  %105 = vmatprep.subr.bf16.mxu0 0
  %106 = vmatpush1.bf16.msra.mxu0 0
  %107 = vmatprep.subr.bf16.mxu0 0
  %108 = vmatpush1.bf16.msra.mxu0 0
  %109 = vmatprep.subr.bf16.mxu0 0
  %110 = vmatpush1.bf16.msra.mxu0 0
  %111 = vmatprep.subr.bf16.mxu0 0
  %112 = vmatpush1.bf16.msra.mxu0 0
  %113 = vmatprep.subr.bf16.mxu0 0
  %114 = vmatpush1.bf16.msra.mxu0 %v91
  %115 = vmatprep.subr.bf16.mxu0 0
  %116 = vmatpush1.bf16.msra.mxu0 %v90
  %117 = vmatprep.subr.bf16.mxu0 0
  %118 = vmatpush2.bf16.msra.mxu0 0
  %119 = vmatprep.subr.bf16.mxu0 0
  %120 = vmatpush2.bf16.msra.mxu0 0
  %121 = vmatprep.subr.bf16.mxu0 0
  %122 = vmatpush2.bf16.msra.mxu0 0
  %123 = vmatprep.subr.bf16.mxu0 0
  %124 = vmatpush2.bf16.msra.mxu0 0
  %125 = vmatprep.subr.bf16.mxu0 0
  %126 = vmatpush2.bf16.msra.mxu0 0
  %127 = vmatprep.subr.bf16.mxu0 0
  %128 = vmatpush2.bf16.msra.mxu0 0
  %129 = vmatprep.subr.bf16.mxu0 0
  %130 = vmatpush2.bf16.msra.mxu0 0
  %131 = vmatprep.subr.bf16.mxu0 0
  %132 = vmatpush2.bf16.msra.mxu0 0
  %133 = vmatprep.mubr.bf16.mxu0 0
  %134 = vmatmul.mubr.bf16.gmra.mxu0 %v96
  %v135 = vpop.f32.mrf.mxu0
  %v136 = vadd.f32 %v55, %v135
  %v137 = vpop.f32.mrf.mxu0
  %v138 = vpop.f32.mrf.mxu0
  %v139 = vadd.f32 %v60, %v138
  %v140 = vpop.f32.mrf.mxu0
  %141 = vmatprep.mubr.bf16.mxu0 0
  %142 = vmatmul.mubr.bf16.gmra.mxu0 %v99
  %v143 = vpop.f32.mrf.mxu0
  %v144 = vadd.f32 %v65, %v143
  %v145 = vpop.f32.mrf.mxu0
  %v146 = vpop.f32.mrf.mxu0
  %v147 = vadd.f32 %v70, %v146
  %v148 = vpop.f32.mrf.mxu0
  %149 = vdwg.mxu0
  %v150 = vmul.f32 %v136, %v136
  %v151 = vmul.f32 %v139, %v139
  %v152 = vmul.f32 %v144, %v144
  %v153 = vmul.f32 %v147, %v147
  %v154 = vadd.f32 %v150, %v151
  %v155 = vadd.f32 %v154, %v152
  %v156 = vadd.f32 %v155, %v153
  %v157 = vrot.slane %v156, 4
  %v158 = vadd.f32 %v156, %v157
  %v159 = vrot.slane %v158, 2
  %v160 = vadd.f32 %v158, %v159
  %v161 = vrot.slane %v160, 1
  %v162 = vadd.f32 %v160, %v161
  %v163 = vmul.f32 %v162, 0.03125
  %v164 = vadd.f32 %v163, 1e-05
  %v165 = vrsqrt.pop %v164
  %v166 = vmul.f32 %v136, %v165
  %v167 = vmul.f32 %v139, %v165
  %v168 = vmul.f32 %v144, %v165
  %v169 = vmul.f32 %v147, %v165
  %v170 = vld [vmem:[%s3] sm:$0xff]
  %v171 = vld [vmem:[%s3 + $0x8] sm:$0xff]
  %v172 = vld [vmem:[%s3 + $0x10] sm:$0xff]
  %v173 = vld [vmem:[%s3 + $0x18] sm:$0xff]
  %175 = vset.pattern.permute.xlu0 0
  %176 = vperm.xlu0 %175, %v170
  %v177 = vpop.permute.xlu0 %176
  %180 = vset.pattern.permute.xlu0 0
  %181 = vperm.xlu0 %180, %v171
  %v182 = vpop.permute.xlu0 %181
  %185 = vset.pattern.permute.xlu0 0
  %186 = vperm.xlu0 %185, %v172
  %v187 = vpop.permute.xlu0 %186
  %190 = vset.pattern.permute.xlu0 0
  %191 = vperm.xlu0 %190, %v173
  %v192 = vpop.permute.xlu0 %191
  %v194 = vmul.f32 %v166, %v177
  %v195 = vmul.f32 %v167, %v182
  %v196 = vmul.f32 %v168, %v187
  %v197 = vmul.f32 %v169, %v192
  %v198 = vld [vmem:[%s4] sm:$0xff]
  %v199 = vld [vmem:[%s4 + $0x8] sm:$0xff]
  %v200 = vld [vmem:[%s4 + $0x10] sm:$0xff]
  %v201 = vld [vmem:[%s4 + $0x18] sm:$0xff]
  %203 = vset.pattern.permute.xlu0 0
  %204 = vperm.xlu0 %203, %v198
  %v205 = vpop.permute.xlu0 %204
  %208 = vset.pattern.permute.xlu0 0
  %209 = vperm.xlu0 %208, %v199
  %v210 = vpop.permute.xlu0 %209
  %213 = vset.pattern.permute.xlu0 0
  %214 = vperm.xlu0 %213, %v200
  %v215 = vpop.permute.xlu0 %214
  %218 = vset.pattern.permute.xlu0 0
  %219 = vperm.xlu0 %218, %v201
  %v220 = vpop.permute.xlu0 %219
  %v222 = vadd.f32 %v194, %v205
  %v223 = vadd.f32 %v195, %v210
  %v224 = vadd.f32 %v196, %v215
  %v225 = vadd.f32 %v197, %v220
  %v226 = vsub.f32 0.0, %v222
  %v227 = vsub.f32 0.0, %v223
  %v228 = vsub.f32 0.0, %v224
  %v229 = vsub.f32 0.0, %v225
  %v230 = vmul.f32 %v226, 1.442695
  %v231 = vpow.pop %v230
  %v232 = vmul.f32 %v227, 1.442695
  %v233 = vpow.pop %v232
  %v234 = vmul.f32 %v228, 1.442695
  %v235 = vpow.pop %v234
  %v236 = vmul.f32 %v229, 1.442695
  %v237 = vpow.pop %v236
  %v238 = vadd.f32 %v231, 1.0
  %v239 = vadd.f32 %v233, 1.0
  %v240 = vadd.f32 %v235, 1.0
  %v241 = vadd.f32 %v237, 1.0
  %v242 = vrcp.pop %v238
  %v243 = vrcp.pop %v239
  %v244 = vrcp.pop %v240
  %v245 = vrcp.pop %v241
  %v246 = vmul.f32 %v222, %v242
  %v247 = vmul.f32 %v223, %v243
  %v248 = vmul.f32 %v224, %v244
  %v249 = vmul.f32 %v225, %v245
  %v250 = vld [vmem:[%s5] sm:$0xf]
  %v251 = vld [vmem:[%s5 + $0x4] sm:$0xf]
  %v252 = vld [vmem:[%s5 + $0x8] sm:$0xf]
  %v253 = vld [vmem:[%s5 + $0xc] sm:$0xf]
  %v254 = vpack.c.bf16 %v247, %v246
  %v255 = vpack.c.bf16 %v249, %v248
  %v256 = vld [vmem:[%s6] sm:$0xff]
  %v257 = vld [vmem:[%s6 + $0x8] sm:$0xff]
  %v258 = vld [vmem:[%s6 + $0x10] sm:$0xff]
  %v259 = vld [vmem:[%s6 + $0x18] sm:$0xff]
  %261 = vset.pattern.permute.xlu0 0
  %262 = vperm.xlu0 %261, %v256
  %v263 = vpop.permute.xlu0 %262
  %266 = vset.pattern.permute.xlu0 0
  %267 = vperm.xlu0 %266, %v257
  %v268 = vpop.permute.xlu0 %267
  %271 = vset.pattern.permute.xlu0 0
  %272 = vperm.xlu0 %271, %v258
  %v273 = vpop.permute.xlu0 %272
  %276 = vset.pattern.permute.xlu0 0
  %277 = vperm.xlu0 %276, %v259
  %v278 = vpop.permute.xlu0 %277
  %v284 = vunpack.c.l.b16 %v250
  %v285 = vunpack.c.l.b16 %v251
  %v286 = vunpack.c.l.b16 %v252
  %v287 = vunpack.c.l.b16 %v253
  %v288 = vpack.c.b16 %v285, %v284
  %v289 = vpack.c.b16 %v287, %v286
  %v291 = vsel %vm94, %v288, 0
  %v294 = vsel %vm94, %v289, 0
  %296 = vmatprep.subr.bf16.mxu0 0
  %297 = vmatpush1.bf16.msra.mxu0 0
  %298 = vmatprep.subr.bf16.mxu0 0
  %299 = vmatpush1.bf16.msra.mxu0 0
  %300 = vmatprep.subr.bf16.mxu0 0
  %301 = vmatpush1.bf16.msra.mxu0 0
  %302 = vmatprep.subr.bf16.mxu0 0
  %303 = vmatpush1.bf16.msra.mxu0 0
  %304 = vmatprep.subr.bf16.mxu0 0
  %305 = vmatpush1.bf16.msra.mxu0 0
  %306 = vmatprep.subr.bf16.mxu0 0
  %307 = vmatpush1.bf16.msra.mxu0 0
  %308 = vmatprep.subr.bf16.mxu0 0
  %309 = vmatpush1.bf16.msra.mxu0 %v255
  %310 = vmatprep.subr.bf16.mxu0 0
  %311 = vmatpush1.bf16.msra.mxu0 %v254
  %312 = vmatprep.subr.bf16.mxu0 0
  %313 = vmatpush2.bf16.msra.mxu0 0
  %314 = vmatprep.subr.bf16.mxu0 0
  %315 = vmatpush2.bf16.msra.mxu0 0
  %316 = vmatprep.subr.bf16.mxu0 0
  %317 = vmatpush2.bf16.msra.mxu0 0
  %318 = vmatprep.subr.bf16.mxu0 0
  %319 = vmatpush2.bf16.msra.mxu0 0
  %320 = vmatprep.subr.bf16.mxu0 0
  %321 = vmatpush2.bf16.msra.mxu0 0
  %322 = vmatprep.subr.bf16.mxu0 0
  %323 = vmatpush2.bf16.msra.mxu0 0
  %324 = vmatprep.subr.bf16.mxu0 0
  %325 = vmatpush2.bf16.msra.mxu0 0
  %326 = vmatprep.subr.bf16.mxu0 0
  %327 = vmatpush2.bf16.msra.mxu0 0
  %328 = vmatprep.mubr.bf16.mxu0 0
  %329 = vmatmul.mubr.bf16.gmra.mxu0 %v291
  %v330 = vpop.f32.mrf.mxu0
  %v331 = vadd.f32 %v263, %v330
  %v332 = vpop.f32.mrf.mxu0
  %v333 = vpop.f32.mrf.mxu0
  %v334 = vadd.f32 %v268, %v333
  %v335 = vpop.f32.mrf.mxu0
  %336 = vmatprep.mubr.bf16.mxu0 0
  %337 = vmatmul.mubr.bf16.gmra.mxu0 %v294
  %v338 = vpop.f32.mrf.mxu0
  %v339 = vadd.f32 %v273, %v338
  %v340 = vpop.f32.mrf.mxu0
  %v341 = vpop.f32.mrf.mxu0
  %v342 = vadd.f32 %v278, %v341
  %v343 = vpop.f32.mrf.mxu0
  %344 = vdwg.mxu0
  %v345 = vmul.f32 %v331, %v331
  %v346 = vmul.f32 %v334, %v334
  %v347 = vmul.f32 %v339, %v339
  %v348 = vmul.f32 %v342, %v342
  %v349 = vadd.f32 %v345, %v346
  %v350 = vadd.f32 %v349, %v347
  %v351 = vadd.f32 %v350, %v348
  %v352 = vrot.slane %v351, 4
  %v353 = vadd.f32 %v351, %v352
  %v354 = vrot.slane %v353, 2
  %v355 = vadd.f32 %v353, %v354
  %v356 = vrot.slane %v355, 1
  %v357 = vadd.f32 %v355, %v356
  %v358 = vmul.f32 %v357, 0.03125
  %v359 = vadd.f32 %v358, 1e-05
  %v360 = vrsqrt.pop %v359
  %v361 = vmul.f32 %v331, %v360
  %v362 = vmul.f32 %v334, %v360
  %v363 = vmul.f32 %v339, %v360
  %v364 = vmul.f32 %v342, %v360
  %v365 = vld [vmem:[%s7] sm:$0xff]
  %v366 = vld [vmem:[%s7 + $0x8] sm:$0xff]
  %v367 = vld [vmem:[%s7 + $0x10] sm:$0xff]
  %v368 = vld [vmem:[%s7 + $0x18] sm:$0xff]
  %370 = vset.pattern.permute.xlu0 0
  %371 = vperm.xlu0 %370, %v365
  %v372 = vpop.permute.xlu0 %371
  %375 = vset.pattern.permute.xlu0 0
  %376 = vperm.xlu0 %375, %v366
  %v377 = vpop.permute.xlu0 %376
  %380 = vset.pattern.permute.xlu0 0
  %381 = vperm.xlu0 %380, %v367
  %v382 = vpop.permute.xlu0 %381
  %385 = vset.pattern.permute.xlu0 0
  %386 = vperm.xlu0 %385, %v368
  %v387 = vpop.permute.xlu0 %386
  %v389 = vmul.f32 %v361, %v372
  %v390 = vmul.f32 %v362, %v377
  %v391 = vmul.f32 %v363, %v382
  %v392 = vmul.f32 %v364, %v387
  %v393 = vld [vmem:[%s8] sm:$0xff]
  %v394 = vld [vmem:[%s8 + $0x8] sm:$0xff]
  %v395 = vld [vmem:[%s8 + $0x10] sm:$0xff]
  %v396 = vld [vmem:[%s8 + $0x18] sm:$0xff]
  %398 = vset.pattern.permute.xlu0 0
  %399 = vperm.xlu0 %398, %v393
  %v400 = vpop.permute.xlu0 %399
  %403 = vset.pattern.permute.xlu0 0
  %404 = vperm.xlu0 %403, %v394
  %v405 = vpop.permute.xlu0 %404
  %408 = vset.pattern.permute.xlu0 0
  %409 = vperm.xlu0 %408, %v395
  %v410 = vpop.permute.xlu0 %409
  %413 = vset.pattern.permute.xlu0 0
  %414 = vperm.xlu0 %413, %v396
  %v415 = vpop.permute.xlu0 %414
  %v417 = vadd.f32 %v389, %v400
  %v418 = vadd.f32 %v390, %v405
  %v419 = vadd.f32 %v391, %v410
  %v420 = vadd.f32 %v392, %v415
  %v421 = vsub.f32 0.0, %v417
  %v422 = vsub.f32 0.0, %v418
  %v423 = vsub.f32 0.0, %v419
  %v424 = vsub.f32 0.0, %v420
  %v425 = vmul.f32 %v421, 1.442695
  %v426 = vpow.pop %v425
  %v427 = vmul.f32 %v422, 1.442695
  %v428 = vpow.pop %v427
  %v429 = vmul.f32 %v423, 1.442695
  %v430 = vpow.pop %v429
  %v431 = vmul.f32 %v424, 1.442695
  %v432 = vpow.pop %v431
  %v433 = vadd.f32 %v426, 1.0
  %v434 = vadd.f32 %v428, 1.0
  %v435 = vadd.f32 %v430, 1.0
  %v436 = vadd.f32 %v432, 1.0
  %v437 = vrcp.pop %v433
  %v438 = vrcp.pop %v434
  %v439 = vrcp.pop %v435
  %v440 = vrcp.pop %v436
  %v441 = vmul.f32 %v417, %v437
  %v442 = vmul.f32 %v418, %v438
  %v443 = vmul.f32 %v419, %v439
  %v444 = vmul.f32 %v420, %v440
  %v445 = vld [vmem:[%s9] sm:$0xff]
  %v446 = vld [vmem:[%s9 + $0x8] sm:$0xff]
  %v447 = vld [vmem:[%s9 + $0x10] sm:$0xff]
  %v448 = vld [vmem:[%s9 + $0x18] sm:$0xff]
  %450 = vset.pattern.permute.xlu0 0
  %451 = vperm.xlu0 %450, %v445
  %v452 = vpop.permute.xlu0 %451
  %455 = vset.pattern.permute.xlu0 0
  %456 = vperm.xlu0 %455, %v446
  %v457 = vpop.permute.xlu0 %456
  %460 = vset.pattern.permute.xlu0 0
  %461 = vperm.xlu0 %460, %v447
  %v462 = vpop.permute.xlu0 %461
  %465 = vset.pattern.permute.xlu0 0
  %466 = vperm.xlu0 %465, %v448
  %v467 = vpop.permute.xlu0 %466
  %v469 = vmul.f32 %v441, %v452
  %v470 = vmul.f32 %v442, %v457
  %v471 = vmul.f32 %v443, %v462
  %v472 = vmul.f32 %v444, %v467
  %v473 = vadd.f32 %v469, %v470
  %v474 = vadd.f32 %v473, %v471
  %v475 = vadd.f32 %v474, %v472
  %v476 = vrot.slane %v475, 4
  %v477 = vadd.f32 %v475, %v476
  %v478 = vrot.slane %v477, 2
  %v479 = vadd.f32 %v477, %v478
  %v480 = vrot.slane %v479, 1
  %v481 = vadd.f32 %v479, %v480
  %s482 = sld [smem:[#allocation2]]
  %v483 = vstv %s482
  %v484 = vadd.f32 %v481, %v483
  %485 = vst [vmem:[%s11] sm:$0x1] %v484
  // Predicated region
  $region46: #{projection_discriminator.1} parent=0 // pred_check
    _
  $region47: #{projection_discriminator.1} parent=0 // pred_check_branch
    %487 = sbr.rel (0) target = $region49
  $region48: #{projection_discriminator.1} parent=0 // pred_region
    _
  $region49: #{projection_discriminator.1} parent=0 // pred_fallthru
    _
  // Predicated region
  $region50: #{projection_discriminator.1} parent=0 // pred_check
    _
  $region51: #{projection_discriminator.1} parent=0 // pred_check_branch
    %489 = sbr.rel (0) target = $region53
  $region52: #{projection_discriminator.1} parent=0 // pred_region
    _
  $region53: #{projection_discriminator.1} parent=0 // pred_fallthru
    _

</llo_original>
